<compile_context>
chip_gen: v5e
topology: v5e:2x2
jax: 0.10.0
libtpu: 0.0.40
codegen_flags: <defaults>
</compile_context>

<pallas_src>
import functools

import jax
import jax.numpy as jnp
from jax.experimental import pallas as pl
from jax.experimental.pallas import tpu as pltpu

_EPS = 1e-5  # PyTorch BatchNorm1d default eps
_VMEM_LIMIT = 48 * 1024 * 1024  # above the 16/32 MiB scoped defaults, < v7x physical


# ---------------------------------------------------------------------------
# In-kernel helpers (per grid step = TB batch rows; channels on sublanes,
# L on lanes).
# ---------------------------------------------------------------------------
def _zero_pad_columns(hpad_ref, pad, l):
    """Zero the `pad` left/right lane columns of the padded-activation scratch."""
    if pad > 0:
        tb, c, _ = hpad_ref.shape
        z = jnp.zeros((tb, c, pad), hpad_ref.dtype)
        hpad_ref[:, :, :pad] = z
        hpad_ref[:, :, pad + l:] = z


def _moment_rows(acc_sum, acc_sq):
    """(C, L) row-sums of y and y*y -> (2, C): [sum, sumsq], channels lane-dense."""
    both = jnp.concatenate([acc_sum[None], acc_sq[None]], axis=0)  # (2, C, L)
    return jnp.sum(both, axis=-1)                                  # (2, C)


def _bn1_relu_conv2_row(h, bn1_ref, w2_ref, hpad_ref, b, *, ksize, pad, l_out):
    """Folded BN1 FMA + ReLU + conv2 for one batch row.

    h: (C_half, L) f32 conv1 output.  Returns pre-BN2 conv2 output (C_out, L_out) f32.
    """
    l = h.shape[-1]
    # BN1 folded to one FMA (f32), ReLU, then bf16 for the conv2 MXU matmuls.
    a = jnp.maximum(h * bn1_ref[0] + bn1_ref[1], 0.0)
    hpad_ref[b, :, pad:pad + l] = a.astype(hpad_ref.dtype)
    # conv2: K accumulating matmuls over lane-shifted windows of the padded
    # scratch (no concatenate copy of the stacked taps).
    y = jnp.dot(w2_ref[0], hpad_ref[b, :, 0:l_out],
                preferred_element_type=jnp.float32)
    for k in range(1, ksize):
        y += jnp.dot(w2_ref[k], hpad_ref[b, :, k:k + l_out],
                     preferred_element_type=jnp.float32)
    return y


# ---------------------------------------------------------------------------
# Kernels
# ---------------------------------------------------------------------------
def _conv1_stats_kernel(x_ref, w1_ref, stats_ref):
    """conv1 (1x1) on TB rows -> accumulate (2, C_half) [sum, sumsq]."""
    @pl.when(pl.program_id(0) == 0)
    def _init():
        stats_ref[...] = jnp.zeros_like(stats_ref)

    tb, _, l = x_ref.shape
    c_half = w1_ref.shape[0]
    hs = jnp.zeros((c_half, l), jnp.float32)
    hq = jnp.zeros((c_half, l), jnp.float32)
    for b in range(tb):  # unrolled: TB small, plain 2-D MXU matmuls
        h = jnp.dot(w1_ref[...], x_ref[b], preferred_element_type=jnp.float32)
        hs += h
        hq += h * h
    stats_ref[...] += _moment_rows(hs, hq)


def _conv2_stats_kernel(x_ref, w1_ref, bn1_ref, w2_ref, stats_ref, hpad_ref,
                        *, ksize, pad, l_out):
    """conv1 -> BN1+ReLU -> conv2 on TB rows -> accumulate (2, C_out) stats."""
    tb, _, l = x_ref.shape
    c_out = w2_ref.shape[1]

    @pl.when(pl.program_id(0) == 0)
    def _init():
        stats_ref[...] = jnp.zeros_like(stats_ref)
        # Hoisted: batch axis is "arbitrary" (sequential), the scratch persists
        # across grid steps and interior stores never touch the pad columns.
        _zero_pad_columns(hpad_ref, pad, l)

    ys = jnp.zeros((c_out, l_out), jnp.float32)
    yq = jnp.zeros((c_out, l_out), jnp.float32)
    for b in range(tb):
        h = jnp.dot(w1_ref[...], x_ref[b], preferred_element_type=jnp.float32)
        y = _bn1_relu_conv2_row(h, bn1_ref, w2_ref, hpad_ref, b,
                                ksize=ksize, pad=pad, l_out=l_out)
        ys += y
        yq += y * y
    stats_ref[...] += _moment_rows(ys, yq)


def _finalize_kernel(x_ref, w1_ref, bn1_ref, w2_ref, bn2_ref, out_ref, hpad_ref,
                     *, ksize, pad, l_out):
    """Full fused forward: conv1 -> BN1+ReLU -> conv2 -> BN2+ReLU."""
    tb, _, l = x_ref.shape
    # Per-step (not hoisted): this pass's batch axis is "parallel", so on a
    # multi-TensorCore chip the second core never sees program_id==0 and its
    # private scratch would keep garbage pad columns. Two tiny stores/step.
    _zero_pad_columns(hpad_ref, pad, l)

    s2 = bn2_ref[0]
    t2 = bn2_ref[1]
    for b in range(tb):
        h = jnp.dot(w1_ref[...], x_ref[b], preferred_element_type=jnp.float32)
        y = _bn1_relu_conv2_row(h, bn1_ref, w2_ref, hpad_ref, b,
                                ksize=ksize, pad=pad, l_out=l_out)
        out_ref[b] = jnp.maximum(y * s2 + t2, 0.0).astype(out_ref.dtype)


# ---------------------------------------------------------------------------
# Wrapper
# ---------------------------------------------------------------------------
def _pick_tb(n, max_tb=8):
    """Largest divisor of n <= max_tb, keeping >=2 grid steps when n > 1."""
    cap = min(max_tb, n if n == 1 else max(1, n // 2))
    for tb in range(cap, 0, -1):
        if n % tb == 0:
            return tb
    return 1


def _bn_scale_shift(stats, gamma, beta, count):
    """Fold training-mode BN (biased batch var) into packed (2, C, 1) scale/shift."""
    mu = stats[0] / count
    # E[x^2]-E[x]^2 can go slightly negative in f32; clamp before +eps.
    var = jnp.maximum(stats[1] / count - mu * mu, 0.0)
    s = gamma.astype(jnp.float32) * jax.lax.rsqrt(var + _EPS)
    t = beta.astype(jnp.float32) - mu * s
    return jnp.stack([s, t], axis=0)[:, :, None]          # (2, C, 1) f32


def inception_conv1d_block(x, params, kernel_size, stride=1, padding=1,
                           batch_tile=None):
    """x: (N, C_in, L) in PyTorch NCL layout. Returns (N, C_out, L_out) f32."""
    assert stride == 1  # TODO(synk): stride > 1 not implemented
    n, c_in, l = x.shape
    c_half = params["w1"].shape[0]
    c_out = params["w2"].shape[0]
    l_out = (l + 2 * padding - kernel_size) // stride + 1
    lpad = l + 2 * padding

    tb = batch_tile or _pick_tb(n)
    assert n % tb == 0, (n, tb)
    nb = n // tb

    # bf16 MXU operands (also halves HBM traffic for x); BN math stays f32.
    xb = x.astype(jnp.bfloat16)
    w1b = params["w1"][:, :, 0].astype(jnp.bfloat16)                    # (C_half, C_in)
    w2b = jnp.transpose(params["w2"], (2, 0, 1)).astype(jnp.bfloat16)   # (K, C_out, C_half)
    # Conv biases b1/b2 dropped: training-mode BN mean subtraction cancels them.

    full = lambda a: pl.BlockSpec(a.shape, lambda i, _nd=a.ndim: (0,) * _nd)
    x_spec = pl.BlockSpec((tb, c_in, l), lambda i: (i, 0, 0))
    arb = pltpu.CompilerParams(dimension_semantics=("arbitrary",),
                               vmem_limit_bytes=_VMEM_LIMIT)
    par = pltpu.CompilerParams(dimension_semantics=("parallel",),
                               vmem_limit_bytes=_VMEM_LIMIT)

    # ---- pass 1: conv1 -> in-kernel accumulated (2, C_half) stats ----------
    stats1 = pl.pallas_call(
        _conv1_stats_kernel,
        grid=(nb,),
        in_specs=[x_spec, full(w1b)],
        out_specs=pl.BlockSpec((2, c_half), lambda i: (0, 0)),
        out_shape=jax.ShapeDtypeStruct((2, c_half), jnp.float32),
        compiler_params=arb,
    )(xb, w1b)
    bn1 = _bn_scale_shift(stats1, params["g1"], params["be1"], n * l)

    # ---- pass 2: conv1 -> BN1+ReLU -> conv2 -> (2, C_out) stats -------------
    kern2 = functools.partial(_conv2_stats_kernel, ksize=kernel_size,
                              pad=padding, l_out=l_out)
    stats2 = pl.pallas_call(
        kern2,
        grid=(nb,),
        in_specs=[x_spec, full(w1b), full(bn1), full(w2b)],
        out_specs=pl.BlockSpec((2, c_out), lambda i: (0, 0)),
        out_shape=jax.ShapeDtypeStruct((2, c_out), jnp.float32),
        scratch_shapes=[pltpu.VMEM((tb, c_half, lpad), jnp.bfloat16)],
        compiler_params=arb,
    )(xb, w1b, bn1, w2b)
    bn2 = _bn_scale_shift(stats2, params["g2"], params["be2"], n * l_out)

    # ---- pass 3: full fused forward (both BNs folded into single FMAs) ------
    # Recompute conv1/conv2 instead of spilling the pre-BN2 intermediate: at
    # these channel counts the block is HBM-bound and recompute is cheaper.
    kern3 = functools.partial(_finalize_kernel, ksize=kernel_size,
                              pad=padding, l_out=l_out)
    out = pl.pallas_call(
        kern3,
        grid=(nb,),
        in_specs=[x_spec, full(w1b), full(bn1), full(w2b), full(bn2)],
        out_specs=pl.BlockSpec((tb, c_out, l_out), lambda i: (i, 0, 0)),
        out_shape=jax.ShapeDtypeStruct((n, c_out, l_out), jnp.float32),
        scratch_shapes=[pltpu.VMEM((tb, c_half, lpad), jnp.bfloat16)],
        compiler_params=par,
    )(xb, w1b, bn1, w2b, bn2)
    return out  # already NCL — no output transpose


# ---------------------------------------------------------------------------
# Parameters + pure-JAX reference of the PyTorch forward (training-mode BN)
# ---------------------------------------------------------------------------
def init_params(key, in_channels, out_channels, kernel_size):
    c_half = out_channels // 2
    ks = jax.random.split(key, 8)

    def u(k, shape, scale):
        return jax.random.uniform(k, shape, jnp.float32, -scale, scale)

    s1 = 1.0 / (in_channels ** 0.5)
    s2 = 1.0 / ((c_half * kernel_size) ** 0.5)
    return dict(
        w1=u(ks[0], (c_half, in_channels, 1), s1),             # Conv1d(in, out//2, 1)
        b1=u(ks[1], (c_half,), s1),
        g1=1.0 + 0.1 * u(ks[2], (c_half,), 1.0),               # BN1 gamma
        be1=0.1 * u(ks[3], (c_half,), 1.0),                    # BN1 beta
        w2=u(ks[4], (out_channels, c_half, kernel_size), s2),  # Conv1d(out//2, out, k)
        b2=u(ks[5], (out_channels,), s2),
        g2=1.0 + 0.1 * u(ks[6], (out_channels,), 1.0),
        be2=0.1 * u(ks[7], (out_channels,), 1.0),
    )


def reference(x, params, kernel_size, stride=1, padding=1):
    dn = ("NCH", "OIH", "NCH")

    def bn_relu(y, g, b):
        mu = jnp.mean(y, axis=(0, 2), keepdims=True)
        var = jnp.mean((y - mu) ** 2, axis=(0, 2), keepdims=True)
        y = (y - mu) * jax.lax.rsqrt(var + _EPS)
        y = y * g[None, :, None] + b[None, :, None]
        return jnp.maximum(y, 0.0)

    y = jax.lax.conv_general_dilated(x, params["w1"], (1,), [(0, 0)],
                                     dimension_numbers=dn)
    y = y + params["b1"][None, :, None]
    y = bn_relu(y, params["g1"], params["be1"])
    y = jax.lax.conv_general_dilated(y, params["w2"], (stride,),
                                     [(padding, padding)], dimension_numbers=dn)
    y = y + params["b2"][None, :, None]
    y = bn_relu(y, params["g2"], params["be2"])
    return y


if __name__ == "__main__":
    key = jax.random.PRNGKey(0)
    k_x, k_p = jax.random.split(key)

    batch, in_channels, out_channels, kernel_size, length = 4, 4, 8, 3, 16
    x = jax.random.normal(k_x, (batch, in_channels, length), jnp.float32)
    params = init_params(k_p, in_channels, out_channels, kernel_size)

    out = inception_conv1d_block(x, params, kernel_size, stride=1, padding=1)
    out = jax.block_until_ready(out)

    ref = reference(x, params, kernel_size, stride=1, padding=1)
    assert out.shape == ref.shape == (batch, out_channels, length), (out.shape, ref.shape)
    max_err = float(jnp.max(jnp.abs(out - ref)))
    # bf16 MXU operands through two conv+BN stages -> looser tolerance than pure
    # f32 (typical max err ~1e-2); real semantic bugs would show O(1) errors.
    assert jnp.allclose(out, ref, rtol=1e-1, atol=1e-1), max_err
    print("KERNEL_OK")
</pallas_src>

<mosaic_0001>
module attributes {stable_mosaic.version = 11 : i64} {
  func.func @_conv1_stats_kernel(%arg0: i32, %arg1: memref<2x4x16xbf16, #tpu.memory_space<vmem>>, %arg2: memref<4x4xbf16, #tpu.memory_space<vmem>>, %arg3: memref<2x4xf32, #tpu.memory_space<vmem>>) attributes {dimension_semantics = [#tpu.dimension_semantics<arbitrary>], iteration_bounds = array<i64: 2>, scalar_prefetch = 0 : i64, scratch_operands = 0 : i64, tpu.core_type = #tpu.core_type<tc>, window_params = [{transform_indices = @transform_0, window_bounds = array<i64: 2, 4, 16>}, {pipeline_mode = #tpu.pipeline_mode<synchronous>, transform_indices = @transform_1, window_bounds = array<i64: 4, 4>}, {pipeline_mode = #tpu.pipeline_mode<synchronous>, transform_indices = @transform_2, window_bounds = array<i64: 2, 4>}]} {
    %c0_i32 = arith.constant 0 : i32
    %0 = arith.cmpi eq, %arg0, %c0_i32 : i32
    %1 = arith.extui %0 : i1 to i32
    %c0_i32_0 = arith.constant 0 : i32
    %2 = arith.cmpi ne, %1, %c0_i32_0 : i32
    scf.if %2 {
      %cst_17 = arith.constant 0.000000e+00 : f32
      %26 = vector.broadcast %cst_17 : f32 to vector<2x4xf32>
      %c0_18 = arith.constant 0 : index
      %c0_19 = arith.constant 0 : index
      %27 = vector.load %arg3[%c0_18, %c0_19] : memref<2x4xf32, #tpu.memory_space<vmem>>, vector<2x4xf32>
      tpu.vector_store %arg3[%c0_18, %c0_19], %26 {strides = array<i32>} : memref<2x4xf32, #tpu.memory_space<vmem>>, vector<2x4xf32>,
    } else {
    }
    %cst = arith.constant 0.000000e+00 : f32
    %3 = vector.broadcast %cst : f32 to vector<4x16xf32>
    %cst_1 = arith.constant 0.000000e+00 : f32
    %4 = vector.broadcast %cst_1 : f32 to vector<4x16xf32>
    %c0 = arith.constant 0 : index
    %c0_2 = arith.constant 0 : index
    %5 = vector.load %arg2[%c0, %c0_2] : memref<4x4xbf16, #tpu.memory_space<vmem>>, vector<4x4xbf16>
    %c0_3 = arith.constant 0 : index
    %c0_4 = arith.constant 0 : index
    %c0_5 = arith.constant 0 : index
    %6 = vector.load %arg1[%c0_3, %c0_4, %c0_5] : memref<2x4x16xbf16, #tpu.memory_space<vmem>>, vector<1x4x16xbf16>
    %7 = vector.shape_cast %6 : vector<1x4x16xbf16> to vector<4x16xbf16>
    %cst_6 = arith.constant dense<0.000000e+00> : vector<4x16xf32>
    %8 = tpu.matmul %5, %7, %cst_6 {dimension_numbers = #tpu.dot_dimension_numbers<[1], [0], [0], [1], [0, 0, 1, 1], [], []>} : vector<4x4xbf16>, vector<4x16xbf16>, vector<4x16xf32> -> vector<4x16xf32>
    %9 = arith.addf %3, %8 : vector<4x16xf32>
    %10 = arith.mulf %8, %8 : vector<4x16xf32>
    %11 = arith.addf %4, %10 : vector<4x16xf32>
    %c0_7 = arith.constant 0 : index
    %c0_8 = arith.constant 0 : index
    %12 = vector.load %arg2[%c0_7, %c0_8] : memref<4x4xbf16, #tpu.memory_space<vmem>>, vector<4x4xbf16>
    %c1 = arith.constant 1 : index
    %c0_9 = arith.constant 0 : index
    %c0_10 = arith.constant 0 : index
    %13 = vector.load %arg1[%c1, %c0_9, %c0_10] : memref<2x4x16xbf16, #tpu.memory_space<vmem>>, vector<1x4x16xbf16>
    %14 = vector.shape_cast %13 : vector<1x4x16xbf16> to vector<4x16xbf16>
    %cst_11 = arith.constant dense<0.000000e+00> : vector<4x16xf32>
    %15 = tpu.matmul %12, %14, %cst_11 {dimension_numbers = #tpu.dot_dimension_numbers<[1], [0], [0], [1], [0, 0, 1, 1], [], []>} : vector<4x4xbf16>, vector<4x16xbf16>, vector<4x16xf32> -> vector<4x16xf32>
    %16 = arith.addf %9, %15 : vector<4x16xf32>
    %17 = arith.mulf %15, %15 : vector<4x16xf32>
    %18 = arith.addf %11, %17 : vector<4x16xf32>
    %c0_12 = arith.constant 0 : index
    %c0_13 = arith.constant 0 : index
    %19 = vector.load %arg3[%c0_12, %c0_13] : memref<2x4xf32, #tpu.memory_space<vmem>>, vector<2x4xf32>
    %20 = vector.shape_cast %16 : vector<4x16xf32> to vector<1x4x16xf32>
    %21 = vector.shape_cast %18 : vector<4x16xf32> to vector<1x4x16xf32>
    %22 = tpu.concatenate %20, %21 in 0 : vector<1x4x16xf32>, vector<1x4x16xf32> -> vector<2x4x16xf32>
    %cst_14 = arith.constant dense<0.000000e+00> : vector<2x4xf32>
    %23 = vector.multi_reduction <add>, %22, %cst_14 [2] : vector<2x4x16xf32> to vector<2x4xf32>
    %24 = arith.addf %19, %23 : vector<2x4xf32>
    %c0_15 = arith.constant 0 : index
    %c0_16 = arith.constant 0 : index
    %25 = vector.load %arg3[%c0_15, %c0_16] : memref<2x4xf32, #tpu.memory_space<vmem>>, vector<2x4xf32>
    tpu.vector_store %arg3[%c0_15, %c0_16], %24 {strides = array<i32>} : memref<2x4xf32, #tpu.memory_space<vmem>>, vector<2x4xf32>,
    return
  }
  func.func @transform_0(%arg0: i32) -> (i32, i32, i32) {
    %c0_i32 = arith.constant 0 : i32
    %c0_i32_0 = arith.constant 0 : i32
    %c0_i32_1 = arith.constant 0 : i32
    return %arg0, %c0_i32, %c0_i32_0 : i32, i32, i32
  }
  func.func @transform_1(%arg0: i32) -> (i32, i32) {
    %c0_i32 = arith.constant 0 : i32
    %c0_i32_0 = arith.constant 0 : i32
    %c0_i32_1 = arith.constant 0 : i32
    return %c0_i32, %c0_i32_0 : i32, i32
  }
  func.func @transform_2(%arg0: i32) -> (i32, i32) {
    %c0_i32 = arith.constant 0 : i32
    %c0_i32_0 = arith.constant 0 : i32
    %c0_i32_1 = arith.constant 0 : i32
    return %c0_i32, %c0_i32_0 : i32, i32
  }
}

</mosaic_0001>

<llo_original>
// kernel: tpu_custom_call.1
$region0: #{tpu_custom_call.1}
  #allocation0 [shape = 'u32[]', space=smem, size = 0x4, offset = 0x4, fixed_abs, tag = 'smem constant byte address 0x4 - core index']
  #allocation1 [shape = 'u32[72,128]{1,0:T(1,128)}', space=vmem, size = 0x9000, scoped, tag = 'internal scratch']
  %s0 = inlined_call_operand.hbm [shape: bf16[4,4,16], index: 0, kind: input, shape index: {}]
  %s1 = inlined_call_operand.hbm [shape: bf16[4,4], index: 1, kind: input, shape index: {}]
  %s2 = inlined_call_operand.hbm [shape: f32[2,4], index: 2, kind: output, shape index: {}]
  %s3 = sld [smem:[#allocation0]]
  $region53: #{tpu_custom_call.1} parent=0
    _
  %s5 = ssub.s32 1, %s3
  %s6 = scalar_select 0, %s5, %s3
  $region1: #{tpu_custom_call.1} parent=0
    #allocation2 [shape = 'u8[4096]{0}', space=vmem, size = 0x1000, scoped, tag = 'input window, operand 0']
    #allocation3 [shape = 's32[2]{0}', space=sflag, size = 0x8, scoped, tag = 'scoped memory for tpu_custom_call.1']
    #allocation4 [shape = 's32[2]{0}', space=sflag, size = 0x8, scoped, tag = 'scoped memory for tpu_custom_call.1']
    #allocation5 [shape = 'u8[1024]{0}', space=vmem, size = 0x400, scoped, tag = 'input window, operand 1, single buffered']
    #allocation6 [shape = 's32[1]{0}', space=sflag, size = 0x4, scoped, tag = 'scoped memory for tpu_custom_call.1']
    #allocation7 [shape = 'u8[1024]{0}', space=vmem, size = 0x400, scoped, tag = 'output window, operand 0, single buffered']
    %7 = vsyncpa [#allocation3], 0
    %s8 = scalar_lea.sflag [#allocation3], 1
    %9 = vsyncpa %s8, 0
    %10 = vsyncpa [#allocation6], 0
    %11 = vsyncpa [#allocation4], 0
    loop: start=0, step=1, limit=4
    $region2: #{tpu_custom_call.1} parent=1 // loop_pre_header
      _
    $region3: #{tpu_custom_call.1} parent=1 // loop_header
      %s13 = sphi 0, %s17
      %p14 = scmp.ge.s32.totalorder %s13, 4
      %s23 = sphi 0, %s25
      %s26 = sphi 0, %s23
      %s27 = sphi 0, %s26
      %s43 = sphi 0, %s27
      %s47 = sphi 0, %s47
      %s49 = sphi 0, %s47
      %s50 = sphi 0, %s49
      %s64 = sphi 0, %s50
      %s68 = sphi 0, %s68
      %s70 = sphi 0, %s68
      %s71 = sphi 0, %s70
      %s85 = sphi 0, %s71
    $region4: #{tpu_custom_call.1} parent=1 // loop_header_branch
      %16 = sbr.rel (%p14) target = $region8
    $region5: #{tpu_custom_call.1} parent=1 // loop_body
      %s18 = ssub.s32 %s13, 1
      %s19 = ssub.s32 %s13, 2
      %s20 = sadd.s32 %s13, 1
      %s21 = ssub.s32 %s13, %s20
      %p22 = scmp.eq.s32.totalorder %s21, 0
      %s24 = sadd.s32 %s23, 1
      %s25 = scalar_select %p22, %s23, %s24
      %p28 = pneg %p22
      %p29 = scmp.eq.s32.totalorder %s13, 1
      %p30 = por %p28, %p29
      %p31 = scmp.ne.s32.totalorder %s23, %s26
      %p32 = scmp.eq.s32.totalorder %s13, 0
      %p33 = por %p31, %p32
      %p34 = scmp.ne.s32.totalorder %s23, %s26
      %p35 = scmp.eq.s32.totalorder %s18, 1
      %p36 = por %p34, %p35
      %p37 = scmp.ne.s32.totalorder %s26, %s27
      %p38 = scmp.eq.s32.totalorder %s18, 0
      %p39 = por %p37, %p38
      %p40 = scmp.ne.s32.totalorder %s26, %s27
      %p41 = scmp.eq.s32.totalorder %s19, 1
      %p42 = por %p40, %p41
      %p44 = scmp.ne.s32.totalorder %s27, %s43
      %p45 = scmp.eq.s32.totalorder %s19, 0
      %p46 = por %p44, %p45
      %s48 = sadd.s32 %s47, 1
      %p51 = scmp.eq.s32.totalorder %s13, 1
      %p52 = scmp.ne.s32.totalorder %s47, %s49
      %p53 = scmp.eq.s32.totalorder %s13, 0
      %p54 = por %p52, %p53
      %p55 = scmp.ne.s32.totalorder %s47, %s49
      %p56 = scmp.eq.s32.totalorder %s18, 1
      %p57 = por %p55, %p56
      %p58 = scmp.ne.s32.totalorder %s49, %s50
      %p59 = scmp.eq.s32.totalorder %s18, 0
      %p60 = por %p58, %p59
      %p61 = scmp.ne.s32.totalorder %s49, %s50
      %p62 = scmp.eq.s32.totalorder %s19, 1
      %p63 = por %p61, %p62
      %p65 = scmp.ne.s32.totalorder %s50, %s64
      %p66 = scmp.eq.s32.totalorder %s19, 0
      %p67 = por %p65, %p66
      %s69 = sadd.s32 %s68, 1
      %p72 = scmp.eq.s32.totalorder %s13, 1
      %p73 = scmp.ne.s32.totalorder %s68, %s70
      %p74 = scmp.eq.s32.totalorder %s13, 0
      %p75 = por %p73, %p74
      %p76 = scmp.ne.s32.totalorder %s68, %s70
      %p77 = scmp.eq.s32.totalorder %s18, 1
      %p78 = por %p76, %p77
      %p79 = scmp.ne.s32.totalorder %s70, %s71
      %p80 = scmp.eq.s32.totalorder %s18, 0
      %p81 = por %p79, %p80
      %p82 = scmp.ne.s32.totalorder %s70, %s71
      %p83 = scmp.eq.s32.totalorder %s19, 1
      %p84 = por %p82, %p83
      %p86 = scmp.ne.s32.totalorder %s71, %s85
      %p87 = scmp.eq.s32.totalorder %s19, 0
      %p88 = por %p86, %p87
      %p89 = scmp.le.s32.totalorder 1, %s13
      %p90 = scmp.lt.s32.totalorder %s13, 3
      %p91 = pnand %p89, %p90
      %p92 = pneg %p91
      // Predicated region
      $region9: #{tpu_custom_call.1} parent=5 // pred_check
        _
      $region10: #{tpu_custom_call.1} parent=5 // pred_check_branch
        %94 = sbr.rel (%p91) target = $region12
      $region11: #{tpu_custom_call.1} parent=5 // pred_region
        %s95 = ssub.s32 %s13, 1
        // Predicated region
        $region13: #{tpu_custom_call.1} parent=11 // pred_check
          %p96 = pneg %p60
        $region14: #{tpu_custom_call.1} parent=11 // pred_check_branch
          %98 = sbr.rel (%p96) target = $region16
        $region15: #{tpu_custom_call.1} parent=11 // pred_region
          %100 = vsyncadd [#allocation6], 0
          %s102 = sshll.u32 %s1, 4
          %s103 = int_to_ptr.hbm [resolvable:$true] %s102
          %s104 = sshll.u32 [#allocation5], 4
          %s105 = int_to_ptr.vmem [resolvable:$true] %s104
          %107 = dma.hbm_to_vmem [thread:$0]  %s103, 32, %s105, [#allocation6]
        $region16: #{tpu_custom_call.1} parent=11 // pred_fallthru
          _
      $region12: #{tpu_custom_call.1} parent=5 // pred_fallthru
        _
      %p108 = scmp.lt.s32.totalorder %s13, 2
      // Predicated region
      $region17: #{tpu_custom_call.1} parent=5 // pred_check
        %p109 = pneg %p108
      $region18: #{tpu_custom_call.1} parent=5 // pred_check_branch
        %111 = sbr.rel (%p109) target = $region20
      $region19: #{tpu_custom_call.1} parent=5 // pred_region
        // Predicated region
        $region21: #{tpu_custom_call.1} parent=19 // pred_check
          %p112 = pneg %p33
        $region22: #{tpu_custom_call.1} parent=19 // pred_check_branch
          %114 = sbr.rel (%p112) target = $region24
        $region23: #{tpu_custom_call.1} parent=19 // pred_region
          %s115 = sand.u32 %s23, 1
          %s116 = scalar_lea.sflag [#allocation3], %s115
          %s117 = sand.u32 %s23, 1
          %s118 = smul.addr %s117, 4
          %s119 = scalar_lea.vmem [#allocation2], %s118
          %s120 = smul.u32 2, %s13
          %122 = vsyncadd %s116, 0
          %s123 = smul.addr %s120, 2
          %s124 = scalar_lea.hbm %s0, %s123
          %s125 = sshll.u32 %s124, 4
          %s126 = int_to_ptr.hbm [resolvable:$true] %s125
          %s127 = sshll.u32 %s119, 4
          %s128 = int_to_ptr.vmem [resolvable:$true] %s127
          %133 = dma.hbm_to_vmem [thread:$0]  %s126, 64, %s128, %s116, 32, 32, 2
        $region24: #{tpu_custom_call.1} parent=19 // pred_fallthru
          _
      $region20: #{tpu_custom_call.1} parent=5 // pred_fallthru
        _
      %p134 = scmp.le.s32.totalorder 1, %s13
      %p135 = scmp.lt.s32.totalorder %s13, 3
      %p136 = pnand %p134, %p135
      %p137 = pneg %p136
      // Predicated region
      $region25: #{tpu_custom_call.1} parent=5 // pred_check
        _
      $region26: #{tpu_custom_call.1} parent=5 // pred_check_branch
        %139 = sbr.rel (%p136) target = $region28
      $region27: #{tpu_custom_call.1} parent=5 // pred_region
        %s140 = ssub.s32 %s13, 1
        %s141 = sand.u32 %s26, 1
        %s142 = scalar_lea.sflag [#allocation3], %s141
        %s143 = sand.u32 %s26, 1
        %s144 = smul.addr %s143, 4
        %s145 = scalar_lea.vmem [#allocation2], %s144
        // Predicated region
        $region29: #{tpu_custom_call.1} parent=27 // pred_check
          %p146 = pneg %p39
        $region30: #{tpu_custom_call.1} parent=27 // pred_check_branch
          %148 = sbr.rel (%p146) target = $region32
        $region31: #{tpu_custom_call.1} parent=27 // pred_region
          %150 = dma.done %s142, 64
        $region32: #{tpu_custom_call.1} parent=27 // pred_fallthru
          _
        // Predicated region
        $region33: #{tpu_custom_call.1} parent=27 // pred_check
          %p151 = pneg %p60
        $region34: #{tpu_custom_call.1} parent=27 // pred_check_branch
          %153 = sbr.rel (%p151) target = $region36
        $region35: #{tpu_custom_call.1} parent=27 // pred_region
          %155 = dma.done [#allocation6], 32
        $region36: #{tpu_custom_call.1} parent=27 // pred_fallthru
          _
        %s156 = sand.u32 %s26, 1
        %s157 = scalar_lea.sflag [#allocation3], %s156
        %s158 = sand.u32 %s26, 1
        %s159 = smul.addr %s158, 4
        %s160 = scalar_lea.vmem [#allocation2], %s159
        %p161 = pneg %p39
        %p162 = pneg %p36
        %p163 = pneg %p60
        %p164 = pneg %p57
        %p165 = pneg %p81
        %p166 = pneg %p78
        %s167 = smul.u32 2, %s18
        %p169 = scmp.eq.s32.totalorder %s18, 0
        // Predicated region
        $region37: #{tpu_custom_call.1} parent=27 // pred_check
          %p170 = pneg %p169
        $region38: #{tpu_custom_call.1} parent=27 // pred_check_branch
          %172 = sbr.rel (%p170) target = $region40
        $region39: #{tpu_custom_call.1} parent=27 // pred_region
          %vm173 = vcmask 25600
          %174 = vst.msk [vmem:[#allocation7] sm:$0x3] %vm173, 0.0
        $region40: #{tpu_custom_call.1} parent=27 // pred_fallthru
          _
        %v175 = vld [vmem:[#allocation5] sm:$0x3]
        %v176 = vld [vmem:[%s145] sm:$0x3]
        %vm177 = vcmask 31744
        %v179 = vsel %vm177, %v175, 0
        %vm181 = vcmask 1041408
        %v183 = vsel %vm181, %v176, 0
        %185 = vmatpush.bf16.msra.mxu0 0
        %186 = vmatpush.bf16.msra.mxu0 0
        %187 = vmatpush.bf16.msra.mxu0 0
        %188 = vmatpush.bf16.msra.mxu0 0
        %189 = vmatpush.bf16.msra.mxu0 0
        %190 = vmatpush.bf16.msra.mxu0 0
        %191 = vmatpush.bf16.msra.mxu0 0
        %192 = vmatpush.bf16.msra.mxu0 %v183
        %193 = vmatmul.bf16.gmra.mxu0 %v179
        %v194 = vpop.f32.mrf.mxu0
        %v195 = vadd.f32 0.0, %v194
        %v196 = vpop.f32.mrf.mxu0
        %197 = vdwg.mxu0
        %v198 = vadd.f32 %v195, 0.0
        %v199 = vmul.f32 %v195, %v195
        %v200 = vadd.f32 %v199, 0.0
        %s201 = scalar_lea.vmem %s145, 2 [#allocation2]
        %v202 = vld [vmem:[%s201] sm:$0x3]
        %v204 = vsel %vm181, %v202, 0
        %206 = vmatpush.bf16.msra.mxu0 0
        %207 = vmatpush.bf16.msra.mxu0 0
        %208 = vmatpush.bf16.msra.mxu0 0
        %209 = vmatpush.bf16.msra.mxu0 0
        %210 = vmatpush.bf16.msra.mxu0 0
        %211 = vmatpush.bf16.msra.mxu0 0
        %212 = vmatpush.bf16.msra.mxu0 0
        %213 = vmatpush.bf16.msra.mxu0 %v204
        %214 = vmatmul.bf16.gmra.mxu0 %v179
        %v215 = vpop.f32.mrf.mxu0
        %v216 = vadd.f32 0.0, %v215
        %v217 = vpop.f32.mrf.mxu0
        %218 = vdwg.mxu0
        %v219 = vadd.f32 %v198, %v216
        %v220 = vmul.f32 %v216, %v216
        %v221 = vadd.f32 %v200, %v220
        %v222 = vld [vmem:[#allocation7] sm:$0x3]
        %vm223 = vcmask 125952
        %v224 = vsel %vm223, %v219, 0.0
        %225 = vadd.xlane.f32.xlu0 %v224
        %v226 = vpop.xlane.xlu0 %225
        %v227 = vsel %vm223, %v221, 0.0
        %228 = vadd.xlane.f32.xlu0 %v227
        %v229 = vpop.xlane.xlu0 %228
        %v232 = vlaneseq
        %v233 = vand.u32 %v232, 127
        %v234 = vperm.slane %v226, %v233
        %v235 = vperm.slane %v229, %v233
        %vm236 = vcmask 1041409
        %v237 = vsel %vm236, %v235, %v234
        %v239 = vadd.f32 %v222, %v237
        %vm240 = vcmask 25600
        %241 = vst.msk [vmem:[#allocation7] sm:$0x3] %vm240, %v239
        // Predicated region
        $region41: #{tpu_custom_call.1} parent=27 // pred_check
          %p242 = pneg %p78
        $region42: #{tpu_custom_call.1} parent=27 // pred_check_branch
          %244 = sbr.rel (%p242) target = $region44
        $region43: #{tpu_custom_call.1} parent=27 // pred_region
          %246 = vsyncadd [#allocation4], 0
          %s248 = sshll.u32 [#allocation7], 4
          %s249 = int_to_ptr.vmem [resolvable:$true] %s248
          %s250 = sshll.u32 %s2, 4
          %s251 = int_to_ptr.hbm [resolvable:$true] %s250
          %253 = dma.vmem_to_hbm [thread:$0]  %s249, 32, %s251, [#allocation4]
        $region44: #{tpu_custom_call.1} parent=27 // pred_fallthru
          _
        // Predicated region
        $region45: #{tpu_custom_call.1} parent=27 // pred_check
          %p254 = pneg %p78
        $region46: #{tpu_custom_call.1} parent=27 // pred_check_branch
          %256 = sbr.rel (%p254) target = $region48
        $region47: #{tpu_custom_call.1} parent=27 // pred_region
          %258 = dma.done [#allocation4], 32
        $region48: #{tpu_custom_call.1} parent=27 // pred_fallthru
          _
      $region28: #{tpu_custom_call.1} parent=5 // pred_fallthru
        _
      %p259 = scmp.le.s32.totalorder 2, %s13
      // Predicated region
      $region49: #{tpu_custom_call.1} parent=5 // pred_check
        %p260 = pneg %p259
      $region50: #{tpu_custom_call.1} parent=5 // pred_check_branch
        %262 = sbr.rel (%p260) target = $region52
      $region51: #{tpu_custom_call.1} parent=5 // pred_region
        %s263 = ssub.s32 %s13, 2
      $region52: #{tpu_custom_call.1} parent=5 // pred_fallthru
        _
    $region6: #{tpu_custom_call.1} parent=1 // loop_footer
      %s17 = sadd.s32 1, %s13
    $region7: #{tpu_custom_call.1} parent=1 // loop_footer_branch
      %12 = sbr.rel target = $region3
    $region8: #{tpu_custom_call.1} parent=1 // loop_exit
      _
    %264 = vsyncpa [#allocation3], 1
    %s265 = scalar_lea.sflag [#allocation3], 1
    %266 = vsyncpa %s265, 1
    %267 = vsyncpa [#allocation6], 1
    %268 = vsyncpa [#allocation4], 1
    %s269 = scalar_lea.sflag [#allocation4], 1
    %270 = vsyncpa %s269, 1

</llo_original>
